<compile_context>
chip_gen: v6e
topology: v6e:2x2x1
jax: 0.10.0
libtpu: 0.0.40
codegen_flags: <defaults>
</compile_context>

<pallas_src>
import jax
import jax.numpy as jnp
from jax.experimental import pallas as pl
from jax.experimental.pallas import tpu as pltpu


def _round_up(x: int, m: int) -> int:
    return ((x + m - 1) // m) * m


# ---------------------------------------------------------------------------
# Kernel
# ---------------------------------------------------------------------------
def actor_sac_fwd_kernel(state_ref, w1_ref, w2_ref, wd_ref, b_ref, out_ref):
    h1p = w1_ref.shape[1]
    h2p = w2_ref.shape[1]
    ap = wd_ref.shape[1]

    x = state_ref[...]                                            # (TB, S) f32

    # encoder layer 0: Linear (norm already folded into W1/b1) + ReLU
    h = jnp.dot(x.astype(jnp.bfloat16), w1_ref[...],
                preferred_element_type=jnp.float32) + b_ref[0:1, :h1p]
    h = jnp.maximum(h, 0.0)

    # encoder layer 1: Linear (build_mlp deletes the trailing ReLU)
    h = jnp.dot(h.astype(jnp.bfloat16), w2_ref[...],
                preferred_element_type=jnp.float32) + b_ref[1:2, :h2p]

    # decoder_a_avg: Linear, then tanh (padded lanes stay 0 -> tanh(0)=0)
    y = jnp.dot(h.astype(jnp.bfloat16), wd_ref[...],
                preferred_element_type=jnp.float32) + b_ref[2:3, :ap]
    out_ref[...] = jnp.tanh(y)


# ---------------------------------------------------------------------------
# Host-side parameter preparation (fold norm, pad lanes, cast, pack biases)
# ---------------------------------------------------------------------------
def fold_and_pad(p):
    # Fold state normalization into layer 1.  (std is initialized to ones by
    # the module; guard zeros here if a runtime-updated std could contain 0.)
    inv_std = 1.0 / p["std"]                                       # (1, S)
    w1f = p["w1"] * inv_std.reshape(-1, 1)                         # (S, H1)
    b1f = p["b1"] - (p["avg"] * inv_std) @ p["w1"]                 # (1, H1)

    S, H1 = w1f.shape
    H2 = p["w2"].shape[1]
    A = p["wd"].shape[1]
    H1P, H2P, AP = (_round_up(d, 128) for d in (H1, H2, A))
    P = max(H1P, H2P, AP)

    def pad2(w, r_pad, c_pad):
        r, c = w.shape
        return jnp.pad(w, ((0, r_pad - r), (0, c_pad - c)))

    def padb(b, width):
        b = b.reshape(1, -1)
        return jnp.pad(b, ((0, 0), (0, width - b.shape[1])))

    return {
        "w1": pad2(w1f, S, H1P).astype(jnp.bfloat16),
        "w2": pad2(p["w2"], H1P, H2P).astype(jnp.bfloat16),
        "wd": pad2(p["wd"], H2P, AP).astype(jnp.bfloat16),
        "biases": jnp.concatenate(
            [padb(b1f, P), padb(p["b2"], P), padb(p["bd"], P)], axis=0
        ).astype(jnp.float32),                                     # (3, P)
        "state_dim": S,
        "action_dim": A,
    }


# ---------------------------------------------------------------------------
# Pallas wrapper
# ---------------------------------------------------------------------------
def actor_sac_forward(state, kp, *, block_b: int = 256):
    """state: (B, state_dim) f32. kp: output of fold_and_pad()."""
    B, S = state.shape
    assert S == kp["state_dim"]
    A = kp["action_dim"]
    H1P = kp["w1"].shape[1]
    H2P = kp["w2"].shape[1]
    AP = kp["wd"].shape[1]
    P = kp["biases"].shape[1]

    # Batch tile: large tiles for throughput; round small batches up to the
    # 8-row sublane granule.  (Keep block_b <= ~512-1024 on v7x's 64 MiB VMEM.)
    tb = block_b if B > block_b else max(8, _round_up(B, 8))
    Bp = _round_up(B, tb)
    if Bp != B:
        state = jnp.pad(state, ((0, Bp - B), (0, 0)))
    grid = (Bp // tb,)

    weight_bytes = 2 * (S * H1P + H1P * H2P + H2P * AP) + 3 * P * 4
    cost = pl.CostEstimate(
        flops=2 * Bp * (S * H1P + H1P * H2P + H2P * AP),
        transcendentals=Bp * AP,
        bytes_accessed=Bp * S * 4 + Bp * AP * 4 + weight_bytes,
    )

    out = pl.pallas_call(
        actor_sac_fwd_kernel,
        out_shape=jax.ShapeDtypeStruct((Bp, AP), jnp.float32),
        grid=grid,
        in_specs=[
            pl.BlockSpec((tb, S), lambda i: (i, 0)),       # state: tiled on batch
            pl.BlockSpec((S, H1P), lambda i: (0, 0)),      # weights pinned
            pl.BlockSpec((H1P, H2P), lambda i: (0, 0)),
            pl.BlockSpec((H2P, AP), lambda i: (0, 0)),
            pl.BlockSpec((3, P), lambda i: (0, 0)),        # packed biases
        ],
        out_specs=pl.BlockSpec((tb, AP), lambda i: (i, 0)),
        compiler_params=pltpu.CompilerParams(
            dimension_semantics=("parallel",)),
        cost_estimate=cost,
    )(state, kp["w1"], kp["w2"], kp["wd"], kp["biases"])

    return out[:B, :A]


# ---------------------------------------------------------------------------
# Parameter init (mimics PyTorch nn.Linear default U[-1/sqrt(fan_in), +])
# ---------------------------------------------------------------------------
def init_params(key, state_dim, net_dims, action_dim):
    def linear(k, fan_in, fan_out):
        kw, kb = jax.random.split(k)
        bound = 1.0 / jnp.sqrt(fan_in)
        w = jax.random.uniform(kw, (fan_in, fan_out), jnp.float32, -bound, bound)
        b = jax.random.uniform(kb, (1, fan_out), jnp.float32, -bound, bound)
        return w, b

    k1, k2, k3 = jax.random.split(key, 3)
    w1, b1 = linear(k1, state_dim, net_dims[0])
    w2, b2 = linear(k2, net_dims[0], net_dims[1])
    wd, bd = linear(k3, net_dims[1], action_dim)
    return {
        "avg": jnp.zeros((1, state_dim), jnp.float32),   # state_avg (no grad)
        "std": jnp.ones((1, state_dim), jnp.float32),    # state_std
        "w1": w1, "b1": b1,
        "w2": w2, "b2": b2,
        "wd": wd, "bd": bd,
    }


# ---------------------------------------------------------------------------
# References
# ---------------------------------------------------------------------------
def reference_matched(state, kp):
    """Same numeric path as the kernel (folded, padded, bf16 matmul, f32 acc)."""
    h1p = kp["w1"].shape[1]
    h2p = kp["w2"].shape[1]
    ap = kp["wd"].shape[1]
    b = kp["biases"]
    h = jnp.dot(state.astype(jnp.bfloat16), kp["w1"],
                preferred_element_type=jnp.float32) + b[0:1, :h1p]
    h = jnp.maximum(h, 0.0)
    h = jnp.dot(h.astype(jnp.bfloat16), kp["w2"],
                preferred_element_type=jnp.float32) + b[1:2, :h2p]
    y = jnp.dot(h.astype(jnp.bfloat16), kp["wd"],
                preferred_element_type=jnp.float32) + b[2:3, :ap]
    return jnp.tanh(y)[:, :kp["action_dim"]]


def reference_f32(state, p):
    """Original ActorSAC.forward semantics, full f32."""
    x = (state - p["avg"]) / p["std"]
    h = jnp.maximum(x @ p["w1"] + p["b1"], 0.0)
    h = h @ p["w2"] + p["b2"]
    return jnp.tanh(h @ p["wd"] + p["bd"])


# ---------------------------------------------------------------------------
if __name__ == "__main__":
    key = jax.random.PRNGKey(0)
    k_param, k_state = jax.random.split(key)

    batch = 4
    state_dim = 16
    net_dims = [32, 32]
    action_dim = 8

    raw = init_params(k_param, state_dim, net_dims, action_dim)
    kparams = fold_and_pad(raw)
    state = jax.random.normal(k_state, (batch, state_dim), jnp.float32)

    # Single-tile path (default block size)
    out = jax.block_until_ready(actor_sac_forward(state, kparams))
    assert out.shape == (batch, action_dim)
    assert jnp.allclose(out, reference_matched(state, kparams),
                        atol=2e-3, rtol=2e-3), "mismatch vs matched-precision ref"
    assert jnp.allclose(out, reference_f32(state, raw),
                        atol=5e-2, rtol=0.0), "mismatch vs f32 module semantics"

    # Multi-tile grid path (exercises batch tiling / index_map)
    state2 = jax.random.normal(jax.random.PRNGKey(1), (32, state_dim), jnp.float32)
    out2 = jax.block_until_ready(actor_sac_forward(state2, kparams, block_b=8))
    assert out2.shape == (32, action_dim)
    assert jnp.allclose(out2, reference_matched(state2, kparams),
                        atol=2e-3, rtol=2e-3), "mismatch on multi-tile grid"

    print("KERNEL_OK")
</pallas_src>

<mosaic_0001>
module attributes {stable_mosaic.version = 11 : i64} {
  func.func @actor_sac_fwd_kernel(%arg0: i32, %arg1: memref<8x16xf32, #tpu.memory_space<vmem>>, %arg2: memref<16x128xbf16, #tpu.memory_space<vmem>>, %arg3: memref<128x128xbf16, #tpu.memory_space<vmem>>, %arg4: memref<128x128xbf16, #tpu.memory_space<vmem>>, %arg5: memref<3x128xf32, #tpu.memory_space<vmem>>, %arg6: memref<8x128xf32, #tpu.memory_space<vmem>>) attributes {dimension_semantics = [#tpu.dimension_semantics<parallel>], iteration_bounds = array<i64: 1>, scalar_prefetch = 0 : i64, scratch_operands = 0 : i64, tpu.core_type = #tpu.core_type<tc>, window_params = [{transform_indices = @transform_0, window_bounds = array<i64: 8, 16>}, {pipeline_mode = #tpu.pipeline_mode<synchronous>, transform_indices = @transform_1, window_bounds = array<i64: 16, 128>}, {pipeline_mode = #tpu.pipeline_mode<synchronous>, transform_indices = @transform_2, window_bounds = array<i64: 128, 128>}, {pipeline_mode = #tpu.pipeline_mode<synchronous>, transform_indices = @transform_3, window_bounds = array<i64: 128, 128>}, {pipeline_mode = #tpu.pipeline_mode<synchronous>, transform_indices = @transform_4, window_bounds = array<i64: 3, 128>}, {transform_indices = @transform_5, window_bounds = array<i64: 8, 128>}]} {
    %c0 = arith.constant 0 : index
    %c0_0 = arith.constant 0 : index
    %0 = vector.load %arg1[%c0, %c0_0] : memref<8x16xf32, #tpu.memory_space<vmem>>, vector<8x16xf32>
    %1 = arith.truncf %0 : vector<8x16xf32> to vector<8x16xbf16>
    %c0_1 = arith.constant 0 : index
    %c0_2 = arith.constant 0 : index
    %2 = vector.load %arg2[%c0_1, %c0_2] : memref<16x128xbf16, #tpu.memory_space<vmem>>, vector<16x128xbf16>
    %cst = arith.constant dense<0.000000e+00> : vector<8x128xf32>
    %3 = tpu.matmul %1, %2, %cst {dimension_numbers = #tpu.dot_dimension_numbers<[1], [0], [0], [1], [0, 0, 1, 1], [], []>} : vector<8x16xbf16>, vector<16x128xbf16>, vector<8x128xf32> -> vector<8x128xf32>
    %c0_3 = arith.constant 0 : index
    %c0_4 = arith.constant 0 : index
    %4 = vector.load %arg5[%c0_3, %c0_4] : memref<3x128xf32, #tpu.memory_space<vmem>>, vector<1x128xf32>
    %5 = vector.broadcast %4 : vector<1x128xf32> to vector<8x128xf32>
    %6 = arith.addf %3, %5 : vector<8x128xf32>
    %cst_5 = arith.constant 0.000000e+00 : f32
    %7 = vector.broadcast %cst_5 : f32 to vector<8x128xf32>
    %8 = arith.maximumf %6, %7 : vector<8x128xf32>
    %9 = arith.truncf %8 : vector<8x128xf32> to vector<8x128xbf16>
    %c0_6 = arith.constant 0 : index
    %c0_7 = arith.constant 0 : index
    %10 = vector.load %arg3[%c0_6, %c0_7] : memref<128x128xbf16, #tpu.memory_space<vmem>>, vector<128x128xbf16>
    %cst_8 = arith.constant dense<0.000000e+00> : vector<8x128xf32>
    %11 = tpu.matmul %9, %10, %cst_8 {dimension_numbers = #tpu.dot_dimension_numbers<[1], [0], [0], [1], [0, 0, 1, 1], [], []>} : vector<8x128xbf16>, vector<128x128xbf16>, vector<8x128xf32> -> vector<8x128xf32>
    %c1 = arith.constant 1 : index
    %c0_9 = arith.constant 0 : index
    %12 = vector.load %arg5[%c1, %c0_9] : memref<3x128xf32, #tpu.memory_space<vmem>>, vector<1x128xf32>
    %13 = vector.broadcast %12 : vector<1x128xf32> to vector<8x128xf32>
    %14 = arith.addf %11, %13 : vector<8x128xf32>
    %15 = arith.truncf %14 : vector<8x128xf32> to vector<8x128xbf16>
    %c0_10 = arith.constant 0 : index
    %c0_11 = arith.constant 0 : index
    %16 = vector.load %arg4[%c0_10, %c0_11] : memref<128x128xbf16, #tpu.memory_space<vmem>>, vector<128x128xbf16>
    %cst_12 = arith.constant dense<0.000000e+00> : vector<8x128xf32>
    %17 = tpu.matmul %15, %16, %cst_12 {dimension_numbers = #tpu.dot_dimension_numbers<[1], [0], [0], [1], [0, 0, 1, 1], [], []>} : vector<8x128xbf16>, vector<128x128xbf16>, vector<8x128xf32> -> vector<8x128xf32>
    %c2 = arith.constant 2 : index
    %c0_13 = arith.constant 0 : index
    %18 = vector.load %arg5[%c2, %c0_13] : memref<3x128xf32, #tpu.memory_space<vmem>>, vector<1x128xf32>
    %19 = vector.broadcast %18 : vector<1x128xf32> to vector<8x128xf32>
    %20 = arith.addf %17, %19 : vector<8x128xf32>
    %21 = math.tanh %20 : vector<8x128xf32>
    %c0_14 = arith.constant 0 : index
    %c0_15 = arith.constant 0 : index
    %22 = vector.load %arg6[%c0_14, %c0_15] : memref<8x128xf32, #tpu.memory_space<vmem>>, vector<8x128xf32>
    tpu.vector_store %arg6[%c0_14, %c0_15], %21 {strides = array<i32>} : memref<8x128xf32, #tpu.memory_space<vmem>>, vector<8x128xf32>,
    return
  }
  func.func @transform_0(%arg0: i32) -> (i32, i32) {
    %c0_i32 = arith.constant 0 : i32
    %c0_i32_0 = arith.constant 0 : i32
    return %arg0, %c0_i32 : i32, i32
  }
  func.func @transform_1(%arg0: i32) -> (i32, i32) {
    %c0_i32 = arith.constant 0 : i32
    %c0_i32_0 = arith.constant 0 : i32
    %c0_i32_1 = arith.constant 0 : i32
    return %c0_i32, %c0_i32_0 : i32, i32
  }
  func.func @transform_2(%arg0: i32) -> (i32, i32) {
    %c0_i32 = arith.constant 0 : i32
    %c0_i32_0 = arith.constant 0 : i32
    %c0_i32_1 = arith.constant 0 : i32
    return %c0_i32, %c0_i32_0 : i32, i32
  }
  func.func @transform_3(%arg0: i32) -> (i32, i32) {
    %c0_i32 = arith.constant 0 : i32
    %c0_i32_0 = arith.constant 0 : i32
    %c0_i32_1 = arith.constant 0 : i32
    return %c0_i32, %c0_i32_0 : i32, i32
  }
  func.func @transform_4(%arg0: i32) -> (i32, i32) {
    %c0_i32 = arith.constant 0 : i32
    %c0_i32_0 = arith.constant 0 : i32
    %c0_i32_1 = arith.constant 0 : i32
    return %c0_i32, %c0_i32_0 : i32, i32
  }
  func.func @transform_5(%arg0: i32) -> (i32, i32) {
    %c0_i32 = arith.constant 0 : i32
    %c0_i32_0 = arith.constant 0 : i32
    return %arg0, %c0_i32 : i32, i32
  }
}

</mosaic_0001>

<llo_original>
// kernel: tpu_custom_call.1
$region0: #{tpu_custom_call.1}
  #allocation0 [shape = 'u32[]', space=smem, size = 0x4, offset = 0x4, fixed_abs, tag = 'smem constant byte address 0x4 - core index']
  #allocation1 [shape = 'u32[144,128]{1,0:T(1,128)}', space=vmem, size = 0x12000, scoped, tag = 'internal scratch']
  %s0 = inlined_call_operand.hbm [shape: f32[8,16], index: 0, kind: input, shape index: {}]
  %s1 = inlined_call_operand.hbm [shape: bf16[16,128], index: 1, kind: input, shape index: {}]
  %s2 = inlined_call_operand.hbm [shape: bf16[128,128], index: 2, kind: input, shape index: {}]
  %s3 = inlined_call_operand.hbm [shape: bf16[128,128], index: 3, kind: input, shape index: {}]
  %s4 = inlined_call_operand.vmem [shape: f32[3,128], index: 4, kind: input, shape index: {}]
  %s5 = inlined_call_operand.hbm [shape: f32[8,128], index: 5, kind: output, shape index: {}]
  %s6 = sld [smem:[#allocation0]]
  $region46: #{tpu_custom_call.1} parent=0
    _
  %s8 = ssub.s32 1, %s6
  %s9 = scalar_select 0, %s8, %s6
  $region1: #{tpu_custom_call.1} parent=0
    #allocation2 [shape = 'u8[4096]{0}', space=vmem, size = 0x1000, scoped, tag = 'input window, operand 0, single buffered']
    #allocation3 [shape = 's32[1]{0}', space=sflag, size = 0x4, scoped, tag = 'scoped memory for tpu_custom_call.1']
    #allocation4 [shape = 's32[1]{0}', space=sflag, size = 0x4, scoped, tag = 'scoped memory for tpu_custom_call.1']
    #allocation5 [shape = 'u8[4096]{0}', space=vmem, size = 0x1000, scoped, tag = 'input window, operand 1, single buffered']
    #allocation6 [shape = 's32[1]{0}', space=sflag, size = 0x4, scoped, tag = 'scoped memory for tpu_custom_call.1']
    #allocation7 [shape = 'u8[32768]{0}', space=vmem, size = 0x8000, scoped, tag = 'input window, operand 2, single buffered']
    #allocation8 [shape = 'u8[32768]{0}', space=vmem, size = 0x8000, scoped, tag = 'input window, operand 3, single buffered']
    #allocation9 [shape = 's32[1]{0}', space=sflag, size = 0x4, scoped, tag = 'scoped memory for tpu_custom_call.1']
    #allocation10 [shape = 'u8[4096]{0}', space=vmem, size = 0x1000, scoped, tag = 'output window, operand 0, single buffered']
    %10 = vsyncpa [#allocation3], 0
    %11 = vsyncpa [#allocation6], 0
    %12 = vsyncpa [#allocation9], 0
    %13 = vsyncpa [#allocation4], 0
    // Predicated region
    $region2: #{tpu_custom_call.1} parent=1 // pred_check
      _
    $region3: #{tpu_custom_call.1} parent=1 // pred_check_branch
      %15 = sbr.rel (0) target = $region5
    $region4: #{tpu_custom_call.1} parent=1 // pred_region
      %s17 = ssub.s32 128, 128
      %18 = vsyncadd [#allocation3], %s17
      %s20 = sshll.u32 [#allocation2], 4
      %s21 = int_to_ptr.vmem [resolvable:$true] %s20
      %23 = dma.hbm_to_vmem [thread:$0]  %s0, 128, %s21, [#allocation3]
    $region5: #{tpu_custom_call.1} parent=1 // pred_fallthru
      _
    // Predicated region
    $region6: #{tpu_custom_call.1} parent=1 // pred_check
      _
    $region7: #{tpu_custom_call.1} parent=1 // pred_check_branch
      %25 = sbr.rel (0) target = $region9
    $region8: #{tpu_custom_call.1} parent=1 // pred_region
      %s27 = ssub.s32 128, 128
      %28 = vsyncadd [#allocation6], %s27
      %s29 = sshll.u32 [#allocation5], 4
      %s30 = int_to_ptr.vmem [resolvable:$true] %s29
      %35 = dma.hbm_to_vmem [thread:$0]  %s1, 128, %s30, [#allocation6], 64, 64, 4
    $region9: #{tpu_custom_call.1} parent=1 // pred_fallthru
      _
    // Predicated region
    $region10: #{tpu_custom_call.1} parent=1 // pred_check
      _
    $region11: #{tpu_custom_call.1} parent=1 // pred_check_branch
      %37 = sbr.rel (0) target = $region13
    $region12: #{tpu_custom_call.1} parent=1 // pred_region
      %s39 = ssub.s32 1024, 1024
      %40 = vsyncadd [#allocation6], %s39
      %s41 = sshll.u32 [#allocation7], 4
      %s42 = int_to_ptr.vmem [resolvable:$true] %s41
      %47 = dma.hbm_to_vmem [thread:$0]  %s2, 1024, %s42, [#allocation6], 64, 64, 4
    $region13: #{tpu_custom_call.1} parent=1 // pred_fallthru
      _
    // Predicated region
    $region14: #{tpu_custom_call.1} parent=1 // pred_check
      _
    $region15: #{tpu_custom_call.1} parent=1 // pred_check_branch
      %49 = sbr.rel (0) target = $region17
    $region16: #{tpu_custom_call.1} parent=1 // pred_region
      %s51 = ssub.s32 1024, 1024
      %52 = vsyncadd [#allocation9], %s51
      %s53 = sshll.u32 [#allocation8], 4
      %s54 = int_to_ptr.vmem [resolvable:$true] %s53
      %59 = dma.hbm_to_vmem [thread:$0]  %s3, 1024, %s54, [#allocation9], 64, 64, 4
    $region17: #{tpu_custom_call.1} parent=1 // pred_fallthru
      _
    // Predicated region
    $region18: #{tpu_custom_call.1} parent=1 // pred_check
      _
    $region19: #{tpu_custom_call.1} parent=1 // pred_check_branch
      %61 = sbr.rel (0) target = $region21
    $region20: #{tpu_custom_call.1} parent=1 // pred_region
      _
    $region21: #{tpu_custom_call.1} parent=1 // pred_fallthru
      _
    // Predicated region
    $region22: #{tpu_custom_call.1} parent=1 // pred_check
      _
    $region23: #{tpu_custom_call.1} parent=1 // pred_check_branch
      %63 = sbr.rel (0) target = $region25
    $region24: #{tpu_custom_call.1} parent=1 // pred_region
      %64 = dma.done [#allocation3], 128
    $region25: #{tpu_custom_call.1} parent=1 // pred_fallthru
      _
    // Predicated region
    $region26: #{tpu_custom_call.1} parent=1 // pred_check
      _
    $region27: #{tpu_custom_call.1} parent=1 // pred_check_branch
      %66 = sbr.rel (0) target = $region29
    $region28: #{tpu_custom_call.1} parent=1 // pred_region
      %67 = dma.done [#allocation6], 128
    $region29: #{tpu_custom_call.1} parent=1 // pred_fallthru
      _
    // Predicated region
    $region30: #{tpu_custom_call.1} parent=1 // pred_check
      _
    $region31: #{tpu_custom_call.1} parent=1 // pred_check_branch
      %69 = sbr.rel (0) target = $region33
    $region32: #{tpu_custom_call.1} parent=1 // pred_region
      %70 = dma.done [#allocation6], 1024
    $region33: #{tpu_custom_call.1} parent=1 // pred_fallthru
      _
    // Predicated region
    $region34: #{tpu_custom_call.1} parent=1 // pred_check
      _
    $region35: #{tpu_custom_call.1} parent=1 // pred_check_branch
      %72 = sbr.rel (0) target = $region37
    $region36: #{tpu_custom_call.1} parent=1 // pred_region
      %73 = dma.done [#allocation9], 1024
    $region37: #{tpu_custom_call.1} parent=1 // pred_fallthru
      _
    %v75 = vld [vmem:[#allocation2] sm:$0xff]
    %v76 = vpack.c.bf16 %v75, %v75
    %v77 = vld [vmem:[#allocation5] sm:$0xf]
    %v78 = vld [vmem:[#allocation5 + $0x4] sm:$0xf]
    %v79 = vld [vmem:[%s4] sm:$0x1]
    %v80 = vlaneseq
    %v81 = vshrl.u32 %v80, 7
    %v82 = vsub.s32 0, %v81
    %v83 = vrot.slane %v79, %v82
    %v86 = vunpack.c.l.b16 %v77
    %v87 = vunpack.c.l.b16 %v78
    %v88 = vpack.c.b16 %v87, %v86
    %vm90 = vcmask 130048
    %v92 = vsel %vm90, %v76, 0
    %94 = vmatprep.subr.bf16.mxu0 0
    %95 = vmatpush1.bf16.msra.mxu0 0
    %96 = vmatprep.subr.bf16.mxu0 0
    %97 = vmatpush1.bf16.msra.mxu0 0
    %98 = vmatprep.subr.bf16.mxu0 0
    %99 = vmatpush1.bf16.msra.mxu0 0
    %100 = vmatprep.subr.bf16.mxu0 0
    %101 = vmatpush1.bf16.msra.mxu0 0
    %102 = vmatprep.subr.bf16.mxu0 0
    %103 = vmatpush1.bf16.msra.mxu0 0
    %104 = vmatprep.subr.bf16.mxu0 0
    %105 = vmatpush1.bf16.msra.mxu0 0
    %106 = vmatprep.subr.bf16.mxu0 0
    %107 = vmatpush1.bf16.msra.mxu0 0
    %108 = vmatprep.subr.bf16.mxu0 0
    %109 = vmatpush1.bf16.msra.mxu0 %v88
    %110 = vmatprep.subr.bf16.mxu0 0
    %111 = vmatpush2.bf16.msra.mxu0 0
    %112 = vmatprep.subr.bf16.mxu0 0
    %113 = vmatpush2.bf16.msra.mxu0 0
    %114 = vmatprep.subr.bf16.mxu0 0
    %115 = vmatpush2.bf16.msra.mxu0 0
    %116 = vmatprep.subr.bf16.mxu0 0
    %117 = vmatpush2.bf16.msra.mxu0 0
    %118 = vmatprep.subr.bf16.mxu0 0
    %119 = vmatpush2.bf16.msra.mxu0 0
    %120 = vmatprep.subr.bf16.mxu0 0
    %121 = vmatpush2.bf16.msra.mxu0 0
    %122 = vmatprep.subr.bf16.mxu0 0
    %123 = vmatpush2.bf16.msra.mxu0 0
    %124 = vmatprep.subr.bf16.mxu0 0
    %125 = vmatpush2.bf16.msra.mxu0 0
    %126 = vmatprep.mubr.bf16.mxu0 0
    %127 = vmatmul.mubr.bf16.gmra.mxu0 %v92
    %v128 = vpop.f32.mrf.mxu0
    %v129 = vadd.f32 %v83, %v128
    %v130 = vpop.f32.mrf.mxu0
    %v131 = vpop.f32.mrf.mxu0
    %v132 = vpop.f32.mrf.mxu0
    %133 = vdwg.mxu0
    %v134 = vmax.f32 %v129, 0.0
    %v135 = vpack.c.bf16 %v134, %v134
    %v136 = vld [vmem:[#allocation7] sm:$0xf]
    %v137 = vld [vmem:[#allocation7 + $0x4] sm:$0xf]
    %v138 = vld [vmem:[#allocation7 + $0x8] sm:$0xf]
    %v139 = vld [vmem:[#allocation7 + $0xc] sm:$0xf]
    %v140 = vld [vmem:[#allocation7 + $0x10] sm:$0xf]
    %v141 = vld [vmem:[#allocation7 + $0x14] sm:$0xf]
    %v142 = vld [vmem:[#allocation7 + $0x18] sm:$0xf]
    %v143 = vld [vmem:[#allocation7 + $0x1c] sm:$0xf]
    %v144 = vld [vmem:[#allocation7 + $0x20] sm:$0xf]
    %v145 = vld [vmem:[#allocation7 + $0x24] sm:$0xf]
    %v146 = vld [vmem:[#allocation7 + $0x28] sm:$0xf]
    %v147 = vld [vmem:[#allocation7 + $0x2c] sm:$0xf]
    %v148 = vld [vmem:[#allocation7 + $0x30] sm:$0xf]
    %v149 = vld [vmem:[#allocation7 + $0x34] sm:$0xf]
    %v150 = vld [vmem:[#allocation7 + $0x38] sm:$0xf]
    %v151 = vld [vmem:[#allocation7 + $0x3c] sm:$0xf]
    %v152 = vld [vmem:[%s4 + $0x1] sm:$0x1]
    %v153 = vlaneseq
    %v154 = vshrl.u32 %v153, 7
    %v155 = vsub.s32 0, %v154
    %v156 = vrot.slane %v152, %v155
    %v173 = vunpack.c.l.b16 %v136
    %v174 = vunpack.c.l.b16 %v137
    %v175 = vunpack.c.l.b16 %v138
    %v176 = vunpack.c.l.b16 %v139
    %v177 = vunpack.c.l.b16 %v140
    %v178 = vunpack.c.l.b16 %v141
    %v179 = vunpack.c.l.b16 %v142
    %v180 = vunpack.c.l.b16 %v143
    %v181 = vunpack.c.l.b16 %v144
    %v182 = vunpack.c.l.b16 %v145
    %v183 = vunpack.c.l.b16 %v146
    %v184 = vunpack.c.l.b16 %v147
    %v185 = vunpack.c.l.b16 %v148
    %v186 = vunpack.c.l.b16 %v149
    %v187 = vunpack.c.l.b16 %v150
    %v188 = vunpack.c.l.b16 %v151
    %v189 = vpack.c.b16 %v174, %v173
    %v190 = vpack.c.b16 %v176, %v175
    %v191 = vpack.c.b16 %v178, %v177
    %v192 = vpack.c.b16 %v180, %v179
    %v193 = vpack.c.b16 %v182, %v181
    %v194 = vpack.c.b16 %v184, %v183
    %v195 = vpack.c.b16 %v186, %v185
    %v196 = vpack.c.b16 %v188, %v187
    %205 = vmatprep.subr.bf16.mxu0 0
    %206 = vmatpush1.bf16.msra.mxu0 %v196
    %207 = vmatprep.subr.bf16.mxu0 0
    %208 = vmatpush1.bf16.msra.mxu0 %v195
    %209 = vmatprep.subr.bf16.mxu0 0
    %210 = vmatpush1.bf16.msra.mxu0 %v194
    %211 = vmatprep.subr.bf16.mxu0 0
    %212 = vmatpush1.bf16.msra.mxu0 %v193
    %213 = vmatprep.subr.bf16.mxu0 0
    %214 = vmatpush1.bf16.msra.mxu0 %v192
    %215 = vmatprep.subr.bf16.mxu0 0
    %216 = vmatpush1.bf16.msra.mxu0 %v191
    %217 = vmatprep.subr.bf16.mxu0 0
    %218 = vmatpush1.bf16.msra.mxu0 %v190
    %219 = vmatprep.subr.bf16.mxu0 0
    %220 = vmatpush1.bf16.msra.mxu0 %v189
    %221 = vmatprep.subr.bf16.mxu0 0
    %222 = vmatpush2.bf16.msra.mxu0 0
    %223 = vmatprep.subr.bf16.mxu0 0
    %224 = vmatpush2.bf16.msra.mxu0 0
    %225 = vmatprep.subr.bf16.mxu0 0
    %226 = vmatpush2.bf16.msra.mxu0 0
    %227 = vmatprep.subr.bf16.mxu0 0
    %228 = vmatpush2.bf16.msra.mxu0 0
    %229 = vmatprep.subr.bf16.mxu0 0
    %230 = vmatpush2.bf16.msra.mxu0 0
    %231 = vmatprep.subr.bf16.mxu0 0
    %232 = vmatpush2.bf16.msra.mxu0 0
    %233 = vmatprep.subr.bf16.mxu0 0
    %234 = vmatpush2.bf16.msra.mxu0 0
    %235 = vmatprep.subr.bf16.mxu0 0
    %236 = vmatpush2.bf16.msra.mxu0 0
    %237 = vmatprep.mubr.bf16.mxu0 0
    %238 = vmatmul.mubr.bf16.gmra.mxu0 %v135
    %v239 = vpop.f32.mrf.mxu0
    %v240 = vadd.f32 %v156, %v239
    %v241 = vpop.f32.mrf.mxu0
    %v242 = vpop.f32.mrf.mxu0
    %v243 = vpop.f32.mrf.mxu0
    %244 = vdwg.mxu0
    %v245 = vpack.c.bf16 %v240, %v240
    %v246 = vld [vmem:[#allocation8] sm:$0xf]
    %v247 = vld [vmem:[#allocation8 + $0x4] sm:$0xf]
    %v248 = vld [vmem:[#allocation8 + $0x8] sm:$0xf]
    %v249 = vld [vmem:[#allocation8 + $0xc] sm:$0xf]
    %v250 = vld [vmem:[#allocation8 + $0x10] sm:$0xf]
    %v251 = vld [vmem:[#allocation8 + $0x14] sm:$0xf]
    %v252 = vld [vmem:[#allocation8 + $0x18] sm:$0xf]
    %v253 = vld [vmem:[#allocation8 + $0x1c] sm:$0xf]
    %v254 = vld [vmem:[#allocation8 + $0x20] sm:$0xf]
    %v255 = vld [vmem:[#allocation8 + $0x24] sm:$0xf]
    %v256 = vld [vmem:[#allocation8 + $0x28] sm:$0xf]
    %v257 = vld [vmem:[#allocation8 + $0x2c] sm:$0xf]
    %v258 = vld [vmem:[#allocation8 + $0x30] sm:$0xf]
    %v259 = vld [vmem:[#allocation8 + $0x34] sm:$0xf]
    %v260 = vld [vmem:[#allocation8 + $0x38] sm:$0xf]
    %v261 = vld [vmem:[#allocation8 + $0x3c] sm:$0xf]
    %v262 = vld [vmem:[%s4 + $0x2] sm:$0x1]
    %v263 = vlaneseq
    %v264 = vshrl.u32 %v263, 7
    %v265 = vsub.s32 0, %v264
    %v266 = vrot.slane %v262, %v265
    %v283 = vunpack.c.l.b16 %v246
    %v284 = vunpack.c.l.b16 %v247
    %v285 = vunpack.c.l.b16 %v248
    %v286 = vunpack.c.l.b16 %v249
    %v287 = vunpack.c.l.b16 %v250
    %v288 = vunpack.c.l.b16 %v251
    %v289 = vunpack.c.l.b16 %v252
    %v290 = vunpack.c.l.b16 %v253
    %v291 = vunpack.c.l.b16 %v254
    %v292 = vunpack.c.l.b16 %v255
    %v293 = vunpack.c.l.b16 %v256
    %v294 = vunpack.c.l.b16 %v257
    %v295 = vunpack.c.l.b16 %v258
    %v296 = vunpack.c.l.b16 %v259
    %v297 = vunpack.c.l.b16 %v260
    %v298 = vunpack.c.l.b16 %v261
    %v299 = vpack.c.b16 %v284, %v283
    %v300 = vpack.c.b16 %v286, %v285
    %v301 = vpack.c.b16 %v288, %v287
    %v302 = vpack.c.b16 %v290, %v289
    %v303 = vpack.c.b16 %v292, %v291
    %v304 = vpack.c.b16 %v294, %v293
    %v305 = vpack.c.b16 %v296, %v295
    %v306 = vpack.c.b16 %v298, %v297
    %315 = vmatprep.subr.bf16.mxu0 0
    %316 = vmatpush1.bf16.msra.mxu0 %v306
    %317 = vmatprep.subr.bf16.mxu0 0
    %318 = vmatpush1.bf16.msra.mxu0 %v305
    %319 = vmatprep.subr.bf16.mxu0 0
    %320 = vmatpush1.bf16.msra.mxu0 %v304
    %321 = vmatprep.subr.bf16.mxu0 0
    %322 = vmatpush1.bf16.msra.mxu0 %v303
    %323 = vmatprep.subr.bf16.mxu0 0
    %324 = vmatpush1.bf16.msra.mxu0 %v302
    %325 = vmatprep.subr.bf16.mxu0 0
    %326 = vmatpush1.bf16.msra.mxu0 %v301
    %327 = vmatprep.subr.bf16.mxu0 0
    %328 = vmatpush1.bf16.msra.mxu0 %v300
    %329 = vmatprep.subr.bf16.mxu0 0
    %330 = vmatpush1.bf16.msra.mxu0 %v299
    %331 = vmatprep.subr.bf16.mxu0 0
    %332 = vmatpush2.bf16.msra.mxu0 0
    %333 = vmatprep.subr.bf16.mxu0 0
    %334 = vmatpush2.bf16.msra.mxu0 0
    %335 = vmatprep.subr.bf16.mxu0 0
    %336 = vmatpush2.bf16.msra.mxu0 0
    %337 = vmatprep.subr.bf16.mxu0 0
    %338 = vmatpush2.bf16.msra.mxu0 0
    %339 = vmatprep.subr.bf16.mxu0 0
    %340 = vmatpush2.bf16.msra.mxu0 0
    %341 = vmatprep.subr.bf16.mxu0 0
    %342 = vmatpush2.bf16.msra.mxu0 0
    %343 = vmatprep.subr.bf16.mxu0 0
    %344 = vmatpush2.bf16.msra.mxu0 0
    %345 = vmatprep.subr.bf16.mxu0 0
    %346 = vmatpush2.bf16.msra.mxu0 0
    %347 = vmatprep.mubr.bf16.mxu0 0
    %348 = vmatmul.mubr.bf16.gmra.mxu0 %v245
    %v349 = vpop.f32.mrf.mxu0
    %v350 = vadd.f32 %v266, %v349
    %v351 = vpop.f32.mrf.mxu0
    %v352 = vpop.f32.mrf.mxu0
    %v353 = vpop.f32.mrf.mxu0
    %354 = vdwg.mxu0
    %v355 = vtanh.pop %v350
    %356 = vst [vmem:[#allocation10] sm:$0xff] %v355
    // Predicated region
    $region38: #{tpu_custom_call.1} parent=1 // pred_check
      _
    $region39: #{tpu_custom_call.1} parent=1 // pred_check_branch
      %358 = sbr.rel (0) target = $region41
    $region40: #{tpu_custom_call.1} parent=1 // pred_region
      %s360 = ssub.s32 128, 128
      %361 = vsyncadd [#allocation4], %s360
      %s363 = sshll.u32 [#allocation10], 4
      %s364 = int_to_ptr.vmem [resolvable:$true] %s363
      %366 = dma.vmem_to_hbm [thread:$0]  %s364, 128, %s5, [#allocation4]
    $region41: #{tpu_custom_call.1} parent=1 // pred_fallthru
      _
    // Predicated region
    $region42: #{tpu_custom_call.1} parent=1 // pred_check
      _
    $region43: #{tpu_custom_call.1} parent=1 // pred_check_branch
      %368 = sbr.rel (0) target = $region45
    $region44: #{tpu_custom_call.1} parent=1 // pred_region
      %369 = dma.done [#allocation4], 128
    $region45: #{tpu_custom_call.1} parent=1 // pred_fallthru
      _
    %370 = vsyncpa [#allocation3], 1
    %371 = vsyncpa [#allocation6], 1
    %372 = vsyncpa [#allocation9], 1
    %373 = vsyncpa [#allocation4], 1

</llo_original>
